<compile_context>
chip_gen: v5e
topology: v5e:2x2
jax: 0.10.0
libtpu: 0.0.40
codegen_flags: <defaults>
</compile_context>

<pallas_src>
import jax
import jax.numpy as jnp
from jax.experimental import pallas as pl
from jax.experimental.pallas import tpu as pltpu

_LANE = 128


def _cdiv(a, b):
    return -(-a // b)


def _round_up(a, b):
    return _cdiv(a, b) * b


def _vmem_capacity_bytes():
    try:
        return int(pltpu.get_tpu_info().vmem_capacity_bytes)
    except Exception:
        return 64 * 1024 * 1024          # conservative: v7x per-core budget


def _make_single_pass_kernel():
    """grid_k == 1: whole H fits in the block -> no accumulator, no mask."""

    def kernel(x_ref, o_ref):
        # x_ref: (row_blk, H, W).  Reduce H first (mostly elementwise VPU
        # maxima across sublane vregs), then one batched cross-lane reduce
        # over the (row_blk, W) partial instead of per-slice lane reduces.
        part = jnp.max(x_ref[...], axis=1)                   # (row_blk, W)
        o_ref[...] = jnp.max(part, axis=-1, keepdims=True)   # (row_blk, 1)

    return kernel


def _make_multi_pass_kernel(*, h, h_blk, needs_mask, fill):
    """grid_k > 1: running max over H tiles held in VMEM scratch."""

    def kernel(x_ref, o_ref, acc_ref):
        k = pl.program_id(1)
        last = pl.num_programs(1) - 1

        @pl.when(k == 0)
        def _init():
            acc_ref[...] = jnp.full(acc_ref.shape, fill, acc_ref.dtype)

        def _accum(x):
            acc_ref[...] = jnp.maximum(acc_ref[...], jnp.max(x, axis=1))

        if needs_mask:
            # Mask arithmetic only runs on the single ragged tail block;
            # every full block stays purely DMA-bound.
            @pl.when(k != last)
            def _full():
                _accum(x_ref[...])

            @pl.when(k == last)
            def _tail():
                x = x_ref[...]
                hidx = jax.lax.broadcasted_iota(jnp.int32, x.shape, 1)
                _accum(jnp.where(hidx + k * h_blk < h, x, fill))
        else:
            _accum(x_ref[...])

        @pl.when(k == last)
        def _finalize():
            o_ref[...] = jnp.max(acc_ref[...], axis=-1, keepdims=True)

    return kernel


def global_max_pooling_2d(x, *, target_block_bytes=None):
    """x: (N, C, H, W) -> (N, C), max over H and W (== torch.amax dim=(-2,-1))."""
    n, c, h, w = x.shape
    rows = n * c
    dtype = x.dtype
    itemsize = jnp.dtype(dtype).itemsize

    # Leading-dim-only reshape: a bitcast of the native tiled layout, so the
    # kernel reads HBM directly with no relayout pass.
    x3 = x.reshape(rows, h, w)

    # Identity element of max for this dtype.
    if jnp.issubdtype(dtype, jnp.floating):
        fill = float("-inf")
    else:
        fill = int(jnp.iinfo(dtype).min)

    # Sublane multiple for this dtype: 8 (32-bit), 16 (16-bit), 32 (8-bit).
    sub = 8 * max(1, 4 // itemsize)

    # Padded (lane/sublane) accounting: both the HBM-resident layout and the
    # VMEM block pad W to 128 lanes and H tiles to `sub` sublanes, so blocks
    # (and the VMEM limit) are sized on padded bytes, not nominal bytes.
    w_pad = _round_up(w, _LANE)

    vmem_cap = _vmem_capacity_bytes()
    if target_block_bytes is None:
        # ~16 MiB blocks amortize per-grid-step overhead on all generations;
        # 2x double-buffered blocks fit v7x's 64 MiB with headroom.
        target_block_bytes = min(16 << 20, max(2 << 20, vmem_cap // 4))

    # --- reduction (H) tiling: keep full H per block (no accumulator, no
    # masking, single sweep) whenever a minimally-aligned row tile fits.
    min_row_blk = min(rows, sub)          # output-alignment floor for row tiles
    slice_bytes_full = _round_up(h, sub) * w_pad * itemsize
    if min_row_blk * slice_bytes_full <= target_block_bytes:
        h_blk = h
    else:
        h_blk = (target_block_bytes // (min_row_blk * w_pad * itemsize) // sub) * sub
        h_blk = max(sub, h_blk)
        if h_blk >= h:
            h_blk = h
    grid_k = _cdiv(h, h_blk)
    needs_mask = (grid_k > 1) and (h % h_blk != 0)

    # --- row tiling (leading dim of the input block, but second-to-last dim
    # of the (rows, 1) output block -> multiple of `sub` or the full extent).
    slice_bytes = _round_up(h_blk, sub) * w_pad * itemsize
    if grid_k == 1:
        row_blk = max(min_row_blk, target_block_bytes // slice_bytes)
    else:
        row_blk = min_row_blk
    row_blk = min(row_blk, rows)
    # Megacore: keep >= 2 row blocks so the "parallel" axis can shard across
    # both v7x TensorCores (harmless extra grid step on v5e/v6e).
    if rows >= 2 * sub:
        row_blk = min(row_blk, (rows // 2 // sub) * sub)
    if row_blk < rows:
        row_blk = max(sub, (row_blk // sub) * sub)
        row_blk = min(row_blk, rows)
    grid_r = _cdiv(rows, row_blk)
    # TODO(synk): degenerate megacore case (rows < 2*sub with huge H*W) would
    # need a two-pass split of the H range into partial maxima to use both
    # v7x TensorCores; not implemented.

    # Scoped-VMEM limit: double-buffered input blocks + accumulator + partial
    # + output, clamped to the physical per-core budget (64 MiB on v7x).
    block_bytes = row_blk * _round_up(h_blk, sub) * w_pad * itemsize
    acc_bytes = (_round_up(row_blk, sub) * w_pad * itemsize) if grid_k > 1 else 0
    part_bytes = _round_up(row_blk, sub) * w_pad * itemsize
    out_bytes = _round_up(row_blk, sub) * _LANE * itemsize
    needed = 2 * block_bytes + acc_bytes + 2 * part_bytes + 2 * out_bytes + (8 << 20)
    vmem_limit = int(min(max(needed, 32 << 20), vmem_cap - (2 << 20)))

    if grid_k == 1:
        kernel = _make_single_pass_kernel()
        grid = (grid_r,)
        in_specs = [pl.BlockSpec((row_blk, h_blk, w), lambda i: (i, 0, 0))]
        out_specs = pl.BlockSpec((row_blk, 1), lambda i: (i, 0))
        scratch_shapes = []
        dim_sem = ("parallel",)
    else:
        kernel = _make_multi_pass_kernel(h=h, h_blk=h_blk,
                                         needs_mask=needs_mask, fill=fill)
        grid = (grid_r, grid_k)
        in_specs = [pl.BlockSpec((row_blk, h_blk, w), lambda i, k: (i, k, 0))]
        out_specs = pl.BlockSpec((row_blk, 1), lambda i, k: (i, 0))
        scratch_shapes = [pltpu.VMEM((row_blk, w), dtype)]
        dim_sem = ("parallel", "arbitrary")

    out = pl.pallas_call(
        kernel,
        out_shape=jax.ShapeDtypeStruct((rows, 1), dtype),
        grid=grid,
        in_specs=in_specs,
        out_specs=out_specs,
        scratch_shapes=scratch_shapes,
        compiler_params=pltpu.CompilerParams(
            dimension_semantics=dim_sem,
            vmem_limit_bytes=vmem_limit),
    )(x3)

    # TODO(synk): for tiny spatial sizes (e.g. 7x7 pooling heads) a
    # channels-last (N, H, W, C) upstream layout would put C on the lane axis
    # and avoid the padded-lane HBM reads and 1-lane masked output stores.
    return out.reshape(n, c)


if __name__ == "__main__":
    key = jax.random.PRNGKey(0)
    x = jax.random.normal(key, (2, 4, 16, 16), dtype=jnp.float32)

    # Default path: single reduction sweep (grid_k == 1), no accumulator.
    y = global_max_pooling_2d(x)
    jax.block_until_ready(y)
    y_ref = jnp.max(x, axis=(-2, -1))
    assert y.shape == (2, 4), y.shape
    assert y.dtype == x.dtype, y.dtype
    assert jnp.array_equal(y, y_ref), "mismatch vs reference"

    # Multi-step H reduction + ragged-tail masking path (forced small blocks).
    x2 = jax.random.normal(jax.random.PRNGKey(0), (2, 3, 17, 17),
                           dtype=jnp.float32)
    y2 = global_max_pooling_2d(x2, target_block_bytes=8192)
    jax.block_until_ready(y2)
    assert jnp.array_equal(y2, jnp.max(x2, axis=(-2, -1))), "mismatch (tiled H)"

    # bf16 path (different sublane multiple).
    x3 = jax.random.normal(jax.random.PRNGKey(1), (2, 4, 8, 8),
                           dtype=jnp.bfloat16)
    y3 = global_max_pooling_2d(x3)
    jax.block_until_ready(y3)
    assert jnp.array_equal(y3, jnp.max(x3, axis=(-2, -1))), "mismatch (bf16)"

    print("KERNEL_OK")
</pallas_src>

<mosaic_0001>
module attributes {stable_mosaic.version = 11 : i64} {
  func.func @kernel(%arg0: i32, %arg1: memref<8x16x16xf32, #tpu.memory_space<vmem>>, %arg2: memref<8x1xf32, #tpu.memory_space<vmem>>) attributes {dimension_semantics = [#tpu.dimension_semantics<parallel>], iteration_bounds = array<i64: 1>, scalar_prefetch = 0 : i64, scratch_operands = 0 : i64, tpu.core_type = #tpu.core_type<tc>, window_params = [{transform_indices = @transform_0, window_bounds = array<i64: 8, 16, 16>}, {transform_indices = @transform_1, window_bounds = array<i64: 8, 1>}]} {
    %c0 = arith.constant 0 : index
    %c0_0 = arith.constant 0 : index
    %c0_1 = arith.constant 0 : index
    %0 = vector.load %arg1[%c0, %c0_0, %c0_1] : memref<8x16x16xf32, #tpu.memory_space<vmem>>, vector<8x16x16xf32>
    %cst = arith.constant dense<0xFF800000> : vector<8x16xf32>
    %1 = vector.multi_reduction <maximumf>, %0, %cst [1] : vector<8x16x16xf32> to vector<8x16xf32>
    %cst_2 = arith.constant dense<0xFF800000> : vector<8xf32>
    %2 = vector.multi_reduction <maximumf>, %1, %cst_2 [1] : vector<8x16xf32> to vector<8xf32>
    %3 = vector.shape_cast %2 : vector<8xf32> to vector<8x1xf32>
    %c0_3 = arith.constant 0 : index
    %c0_4 = arith.constant 0 : index
    %4 = vector.load %arg2[%c0_3, %c0_4] : memref<8x1xf32, #tpu.memory_space<vmem>>, vector<8x1xf32>
    tpu.vector_store %arg2[%c0_3, %c0_4], %3 {strides = array<i32>} : memref<8x1xf32, #tpu.memory_space<vmem>>, vector<8x1xf32>,
    return
  }
  func.func @transform_0(%arg0: i32) -> (i32, i32, i32) {
    %c0_i32 = arith.constant 0 : i32
    %c0_i32_0 = arith.constant 0 : i32
    %c0_i32_1 = arith.constant 0 : i32
    return %arg0, %c0_i32, %c0_i32_0 : i32, i32, i32
  }
  func.func @transform_1(%arg0: i32) -> (i32, i32) {
    %c0_i32 = arith.constant 0 : i32
    %c0_i32_0 = arith.constant 0 : i32
    return %arg0, %c0_i32 : i32, i32
  }
}

</mosaic_0001>

<llo_original>
// kernel: tpu_custom_call.1
$region0: #{tpu_custom_call.1}
  #allocation0 [shape = 'u32[]', space=smem, size = 0x4, offset = 0x4, fixed_abs, tag = 'smem constant byte address 0x4 - core index']
  #allocation1 [shape = 'u32[72,128]{1,0:T(1,128)}', space=vmem, size = 0x9000, scoped, tag = 'internal scratch']
  %s0 = inlined_call_operand.hbm [shape: f32[8,16,16], index: 0, kind: input, shape index: {}]
  %s1 = inlined_call_operand.vmem [shape: f32[8,1], index: 1, kind: output, shape index: {}]
  %s2 = sld [smem:[#allocation0]]
  $region18: #{tpu_custom_call.1} parent=0
    _
  %s4 = ssub.s32 1, %s2
  %s5 = scalar_select 0, %s4, %s2
  $region1: #{tpu_custom_call.1} parent=0
    #allocation2 [shape = 'u8[65536]{0}', space=vmem, size = 0x10000, scoped, tag = 'input window, operand 0, single buffered']
    #allocation3 [shape = 's32[1]{0}', space=sflag, size = 0x4, scoped, tag = 'scoped memory for tpu_custom_call.1']
    %6 = vsyncpa [#allocation3], 0
    // Predicated region
    $region2: #{tpu_custom_call.1} parent=1 // pred_check
      _
    $region3: #{tpu_custom_call.1} parent=1 // pred_check_branch
      %8 = sbr.rel (0) target = $region5
    $region4: #{tpu_custom_call.1} parent=1 // pred_region
      %10 = vsyncadd [#allocation3], 0
      %s11 = sshll.u32 %s0, 4
      %s12 = int_to_ptr.hbm [resolvable:$true] %s11
      %s13 = sshll.u32 [#allocation2], 4
      %s14 = int_to_ptr.vmem [resolvable:$true] %s13
      %19 = dma.hbm_to_vmem [thread:$0]  %s12, 2048, %s14, [#allocation3], 128, 128, 8
    $region5: #{tpu_custom_call.1} parent=1 // pred_fallthru
      _
    // Predicated region
    $region6: #{tpu_custom_call.1} parent=1 // pred_check
      _
    $region7: #{tpu_custom_call.1} parent=1 // pred_check_branch
      %21 = sbr.rel (0) target = $region9
    $region8: #{tpu_custom_call.1} parent=1 // pred_region
      %23 = dma.done [#allocation3], 2048
    $region9: #{tpu_custom_call.1} parent=1 // pred_fallthru
      _
    %v24 = vld [vmem:[#allocation2] sm:$0xff]
    %v25 = vld [vmem:[#allocation2 + $0x8] sm:$0xff]
    %v26 = vld [vmem:[#allocation2 + $0x10] sm:$0xff]
    %v27 = vld [vmem:[#allocation2 + $0x18] sm:$0xff]
    %v28 = vld [vmem:[#allocation2 + $0x20] sm:$0xff]
    %v29 = vld [vmem:[#allocation2 + $0x28] sm:$0xff]
    %v30 = vld [vmem:[#allocation2 + $0x30] sm:$0xff]
    %v31 = vld [vmem:[#allocation2 + $0x38] sm:$0xff]
    %v32 = vld [vmem:[#allocation2 + $0x40] sm:$0xff]
    %v33 = vld [vmem:[#allocation2 + $0x48] sm:$0xff]
    %v34 = vld [vmem:[#allocation2 + $0x50] sm:$0xff]
    %v35 = vld [vmem:[#allocation2 + $0x58] sm:$0xff]
    %v36 = vld [vmem:[#allocation2 + $0x60] sm:$0xff]
    %v37 = vld [vmem:[#allocation2 + $0x68] sm:$0xff]
    %v38 = vld [vmem:[#allocation2 + $0x70] sm:$0xff]
    %v39 = vld [vmem:[#allocation2 + $0x78] sm:$0xff]
    %vm40 = vcmask 130048
    %v41 = vsel %vm40, %v24, -inf
    %v42 = vsel %vm40, %v25, -inf
    %v43 = vmax.f32 %v41, %v42
    %v44 = vrot.slane %v43, 4
    %v45 = vmax.f32 %v43, %v44
    %v46 = vrot.slane %v45, 2
    %v47 = vmax.f32 %v45, %v46
    %v48 = vrot.slane %v47, 1
    %v49 = vmax.f32 %v47, %v48
    %v50 = vsel %vm40, %v26, -inf
    %v51 = vsel %vm40, %v27, -inf
    %v52 = vmax.f32 %v50, %v51
    %v53 = vrot.slane %v52, 4
    %v54 = vmax.f32 %v52, %v53
    %v55 = vrot.slane %v54, 2
    %v56 = vmax.f32 %v54, %v55
    %v57 = vrot.slane %v56, 1
    %v58 = vmax.f32 %v56, %v57
    %v59 = vsel %vm40, %v28, -inf
    %v60 = vsel %vm40, %v29, -inf
    %v61 = vmax.f32 %v59, %v60
    %v62 = vrot.slane %v61, 4
    %v63 = vmax.f32 %v61, %v62
    %v64 = vrot.slane %v63, 2
    %v65 = vmax.f32 %v63, %v64
    %v66 = vrot.slane %v65, 1
    %v67 = vmax.f32 %v65, %v66
    %v68 = vsel %vm40, %v30, -inf
    %v69 = vsel %vm40, %v31, -inf
    %v70 = vmax.f32 %v68, %v69
    %v71 = vrot.slane %v70, 4
    %v72 = vmax.f32 %v70, %v71
    %v73 = vrot.slane %v72, 2
    %v74 = vmax.f32 %v72, %v73
    %v75 = vrot.slane %v74, 1
    %v76 = vmax.f32 %v74, %v75
    %v77 = vsel %vm40, %v32, -inf
    %v78 = vsel %vm40, %v33, -inf
    %v79 = vmax.f32 %v77, %v78
    %v80 = vrot.slane %v79, 4
    %v81 = vmax.f32 %v79, %v80
    %v82 = vrot.slane %v81, 2
    %v83 = vmax.f32 %v81, %v82
    %v84 = vrot.slane %v83, 1
    %v85 = vmax.f32 %v83, %v84
    %v86 = vsel %vm40, %v34, -inf
    %v87 = vsel %vm40, %v35, -inf
    %v88 = vmax.f32 %v86, %v87
    %v89 = vrot.slane %v88, 4
    %v90 = vmax.f32 %v88, %v89
    %v91 = vrot.slane %v90, 2
    %v92 = vmax.f32 %v90, %v91
    %v93 = vrot.slane %v92, 1
    %v94 = vmax.f32 %v92, %v93
    %v95 = vsel %vm40, %v36, -inf
    %v96 = vsel %vm40, %v37, -inf
    %v97 = vmax.f32 %v95, %v96
    %v98 = vrot.slane %v97, 4
    %v99 = vmax.f32 %v97, %v98
    %v100 = vrot.slane %v99, 2
    %v101 = vmax.f32 %v99, %v100
    %v102 = vrot.slane %v101, 1
    %v103 = vmax.f32 %v101, %v102
    %v104 = vsel %vm40, %v38, -inf
    %v105 = vsel %vm40, %v39, -inf
    %v106 = vmax.f32 %v104, %v105
    %v107 = vrot.slane %v106, 4
    %v108 = vmax.f32 %v106, %v107
    %v109 = vrot.slane %v108, 2
    %v110 = vmax.f32 %v108, %v109
    %v111 = vrot.slane %v110, 1
    %v112 = vmax.f32 %v110, %v111
    %vm121 = vcmask 1041409
    %v122 = vsel %vm121, %v58, %v49
    %vm123 = vcmask 1042434
    %v124 = vsel %vm123, %v67, %v122
    %vm125 = vcmask 1043459
    %v126 = vsel %vm125, %v76, %v124
    %vm127 = vcmask 1044484
    %v128 = vsel %vm127, %v85, %v126
    %vm129 = vcmask 1045509
    %v130 = vsel %vm129, %v94, %v128
    %vm131 = vcmask 1046534
    %v132 = vsel %vm131, %v103, %v130
    %vm133 = vcmask 1047559
    %v134 = vsel %vm133, %v112, %v132
    %v136 = vsel %vm40, %v134, -inf
    %137 = vmax.xlane.f32.xlu0 %v136
    %v138 = vpop.xlane.xlu0 %137
    %vm139 = vcmask 7168
    %140 = vst.msk [vmem:[%s1] sm:$0xff] %vm139, %v138
    // Predicated region
    $region10: #{tpu_custom_call.1} parent=1 // pred_check
      _
    $region11: #{tpu_custom_call.1} parent=1 // pred_check_branch
      %142 = sbr.rel (0) target = $region13
    $region12: #{tpu_custom_call.1} parent=1 // pred_region
      _
    $region13: #{tpu_custom_call.1} parent=1 // pred_fallthru
      _
    // Predicated region
    $region14: #{tpu_custom_call.1} parent=1 // pred_check
      _
    $region15: #{tpu_custom_call.1} parent=1 // pred_check_branch
      %144 = sbr.rel (0) target = $region17
    $region16: #{tpu_custom_call.1} parent=1 // pred_region
      _
    $region17: #{tpu_custom_call.1} parent=1 // pred_fallthru
      _
    %145 = vsyncpa [#allocation3], 1

</llo_original>
